<compile_context>
chip_gen: v5e
topology: v5e:2x2
jax: 0.10.0
libtpu: 0.0.40
codegen_flags: <defaults>
</compile_context>

<pallas_src>
import functools

import jax
import jax.numpy as jnp
from jax.experimental import pallas as pl
from jax.experimental.pallas import tpu as pltpu


def _group_reduce(x, n_groups, group_width, op):
    """Reduce across the E lane groups (each `group_width` lanes wide).

    Every lane group ends up holding the full E-way reduction.  Uses a
    log2(E) roll-doubling tree when E is a power of two (rolls hit the XLU,
    the dependent op chain shrinks from E-1 to ceil(log2 E)).
    """
    total = n_groups * group_width
    if n_groups <= 1:
        return x
    if n_groups & (n_groups - 1) == 0:
        shift = group_width
        while shift < total:
            x = op(x, pltpu.roll(x, shift=shift, axis=1))
            shift *= 2
        return x
    acc = x
    for s in range(1, n_groups):
        acc = op(acc, pltpu.roll(x, shift=s * group_width, axis=1))
    return acc


def _node_features_kernel(n_edges, use_block_diag,
                          x_ref, e_ref, idx_ref,
                          wu_ref, bu_ref, wvg_ref, bvg_ref,
                          we_ref, beg_ref, expand_ref,
                          o_ref):
    Bb, N, H = x_ref.shape
    E = n_edges
    EH = E * H
    BN = Bb * N
    f32 = jnp.float32

    # Flatten the folded batch into the row (sublane) dimension.
    x2 = x_ref[...].reshape(BN, H)                       # (Bb*N, H)
    e2 = e_ref[...].reshape(BN, EH)                      # (Bb*N, E*H) lane-dense
    idx2 = idx_ref[...].reshape(BN, idx_ref.shape[2])    # (Bb*N, Ep)  f32 indices

    # ---- Linear layers (MXU, f32 accumulate) --------------------------------
    Ux = jnp.dot(x2, wu_ref[...], preferred_element_type=f32) + bu_ref[...]
    # to_embedding fused with the per-edge lane tiling on the host:
    # vx_g[r, g*H + h] == Vx[r, h] for every edge slot g.
    vx_g = jnp.dot(x2, wvg_ref[...], preferred_element_type=f32) + bvg_ref[...]
    if use_block_diag:
        # Block-diagonal (EH, EH) edge weight: output stays in the grouped
        # (node-row, edge-major-lane) layout, no (N, E, H) reshape needed.
        Ve = jnp.dot(e2, we_ref[...], preferred_element_type=f32) + beg_ref[...]
    else:
        # TODO(synk): EH > 128 fallback does E per-group matmuls (less
        # MXU-efficient but avoids the E x redundant block-diag FLOPs/VMEM).
        parts = [jnp.dot(e2[:, g * H:(g + 1) * H], we_ref[...],
                         preferred_element_type=f32) for g in range(E)]
        Ve = jnp.concatenate(parts, axis=1) + beg_ref[...]

    # ---- Softmax numerator over the E lane groups (division deferred) -------
    mx = _group_reduce(Ve, E, H, jnp.maximum)
    p = jnp.exp(Ve - mx)                                 # un-normalized softmax
    den = _group_reduce(p, E, H, lambda a, b: a + b)     # identical across groups

    # ---- Gather Vx rows by edge_index: disjoint-mask multiply-accumulate ----
    # idx_lanes[r, g*H + h] = edge_index of edge g of node-row r (exact in f32).
    idx_lanes = jnp.dot(idx2, expand_ref[...], preferred_element_type=f32)
    idx_l3 = idx_lanes.reshape(Bb, N, EH)
    vx_g3 = vx_g.reshape(Bb, N, EH)

    # Masks over m are disjoint, so a sum of masked terms == the select; a
    # pairwise tree keeps the adds independent (no serial N-long chain) and the
    # (Bb,1,EH) row broadcast happens inside the multiply.
    terms = []
    for m in range(N):
        mask_m = (idx_l3 == float(m)).astype(f32)        # (Bb, N, EH)
        terms.append(mask_m * vx_g3[:, m:m + 1, :])      # broadcast in the mul
    while len(terms) > 1:
        nxt = []
        for i in range(0, len(terms) - 1, 2):
            nxt.append(terms[i] + terms[i + 1])
        if len(terms) % 2:
            nxt.append(terms[-1])
        terms = nxt
    gathered = terms[0].reshape(BN, EH)

    # ---- Weighted aggregation over edges, deferred normalization, residual --
    prod = p * gathered
    agg = _group_reduce(prod, E, H, lambda a, b: a + b)  # each group holds the E-sum
    inv_den = pl.reciprocal(den[:, :H], approx=False)    # (Bb*N, H): E x fewer divs
    out = Ux + agg[:, :H] * inv_den
    o_ref[...] = out.reshape(Bb, N, H).astype(o_ref.dtype)


def _largest_divisor_leq(n, cap):
    cap = max(1, min(cap, n))
    for d in range(cap, 0, -1):
        if n % d == 0:
            return d
    return 1


def _vmem_config():
    """Returns (per-step VMEM budget for block sizing, vmem_limit_bytes)."""
    phys = None
    try:
        phys = int(pltpu.get_tpu_info().vmem_capacity_bytes)
    except Exception:
        phys = None
    if phys is None:
        phys = 64 * 1024 * 1024                 # conservative: v7x per-TC VMEM
    if phys >= 96 * 1024 * 1024:
        # v5e / v6e: 128 MiB physical VMEM -> fold more batch per grid step.
        return 40 * 1024 * 1024, 96 * 1024 * 1024
    # v7x (64 MiB per TC) or unknown: stay conservative.
    return 12 * 1024 * 1024, 32 * 1024 * 1024


def node_features(x, e, edge_index, params, n_edges, *, block_b=None,
                  matmul_dtype=jnp.float32):
    """x: (B,N,H) f32, e: (B,N*n_edges,H) f32, edge_index: (B,N*n_edges) int32.

    Weights stored pre-transposed as (H_in, H_out): y = x @ W + b.
    matmul_dtype=jnp.bfloat16 is the recommended production setting on
    v5e/v6e/v7x (MXU-native operands, halved e DMA); default f32 is bit-safe
    against the torch/f32 reference.
    """
    B, N, H = x.shape
    E = n_edges
    NE = N * E
    EH = E * H
    assert e.shape == (B, NE, H)
    assert edge_index.shape == (B, NE)
    wu, bu, wv, bv, we, be = params
    out_dtype = x.dtype

    # ---- Host-side (free / tiny, one-time) re-layouts and weight folding ----
    e_g = e.reshape(B, N, EH)                                   # contiguous view
    Ep = ((E + 7) // 8) * 8                                     # pad K dim for idx matmul
    idx_f = edge_index.reshape(B, N, E).astype(jnp.float32)
    if Ep != E:
        idx_f = jnp.pad(idx_f, ((0, 0), (0, 0), (0, Ep - E)))

    wv_g = jnp.tile(wv, (1, E))            # to_embedding weight, tiled per edge slot
    bv_g = jnp.tile(bv, (1, E))
    be_g = jnp.tile(be, (1, E))
    use_block_diag = EH <= 128             # gate the block-diag trick on one MXU tile
    if use_block_diag:
        we_k = jnp.kron(jnp.eye(E, dtype=we.dtype), we)         # (EH, EH) block-diag
        we_spec_shape = (EH, EH)
    else:
        we_k = we
        we_spec_shape = (H, H)
    lane = jnp.arange(EH)
    expand = (jnp.arange(Ep)[:, None] == (lane // H)[None, :]).astype(jnp.float32)

    mm_dt = jnp.dtype(matmul_dtype)
    x_in = x.astype(mm_dt)
    e_in = e_g.astype(mm_dt)
    wu_in = wu.astype(mm_dt)
    wvg_in = wv_g.astype(mm_dt)
    we_in = we_k.astype(mm_dt)
    # Biases and the 0/1 index-expansion matrix stay exact f32.
    bu_in = bu.astype(jnp.float32)
    bvg_in = bv_g.astype(jnp.float32)
    beg_in = be_g.astype(jnp.float32)

    # ---- Pick the batch fold against a generation-aware VMEM budget ---------
    budget, vmem_limit = _vmem_config()
    if block_b is None:
        item = mm_dt.itemsize
        lp = lambda c: -(-c // 128) * 128                       # lane padding
        rp = -(-N // 8) * 8                                     # sublane padding
        # Double-buffered I/O blocks (x, e in matmul dtype; idx, out in f32),
        # with real padded lane widths.
        io = rp * (item * (lp(H) + lp(EH)) + 4 * (lp(Ep) + lp(H))) * 2
        # In-kernel f32 temporaries (Ve/p/den, vx_g, idx_lanes, prod, agg, ...)
        # plus the N gather-tree leaves.
        tmp = 4 * rp * lp(EH) * (12 + N)
        per_batch = io + tmp
        cap = max(1, budget // per_batch)
        if B >= 2:
            cap = min(cap, B // 2)     # >=2 grid steps so v7x uses both TensorCores
        block_b = _largest_divisor_leq(B, min(cap, 512))
    Bb = block_b
    assert B % Bb == 0

    kernel = functools.partial(_node_features_kernel, E, use_block_diag)
    return pl.pallas_call(
        kernel,
        out_shape=jax.ShapeDtypeStruct((B, N, H), out_dtype),
        grid=(B // Bb,),
        in_specs=[
            pl.BlockSpec((Bb, N, H), lambda i: (i, 0, 0)),     # x
            pl.BlockSpec((Bb, N, EH), lambda i: (i, 0, 0)),    # e (edge-grouped lanes)
            pl.BlockSpec((Bb, N, Ep), lambda i: (i, 0, 0)),    # edge_index (f32, padded)
            pl.BlockSpec((H, H), lambda i: (0, 0)),            # Wu
            pl.BlockSpec((1, H), lambda i: (0, 0)),            # bu
            pl.BlockSpec((H, EH), lambda i: (0, 0)),           # Wv folded + lane-tiled
            pl.BlockSpec((1, EH), lambda i: (0, 0)),           # bv lane-tiled
            pl.BlockSpec(we_spec_shape, lambda i: (0, 0)),     # We (block-diag or plain)
            pl.BlockSpec((1, EH), lambda i: (0, 0)),           # be lane-tiled
            pl.BlockSpec((Ep, EH), lambda i: (0, 0)),          # index lane-expand matrix
        ],
        out_specs=pl.BlockSpec((Bb, N, H), lambda i: (i, 0, 0)),
        compiler_params=pltpu.CompilerParams(
            dimension_semantics=("parallel",),
            vmem_limit_bytes=vmem_limit),
    )(x_in, e_in, idx_f, wu_in, bu_in, wvg_in, bvg_in, we_in, beg_in, expand)


if __name__ == "__main__":
    key = jax.random.PRNGKey(0)
    B, N, E, H = 2, 8, 4, 32        # batch, num_nodes, n_edges, hidden_dim
    NE = N * E
    ks = jax.random.split(key, 12)

    x = jax.random.normal(ks[0], (B, N, H), jnp.float32)
    e = jax.random.normal(ks[1], (B, NE, H), jnp.float32)
    edge_index = jax.random.randint(ks[2], (B, NE), 0, N, jnp.int32)

    # Deterministic parameter init (nn.Linear-style uniform, weights as (H_in, H_out)).
    scale = 1.0 / (H ** 0.5)
    wu = jax.random.uniform(ks[3], (H, H), jnp.float32, -scale, scale)
    bu = jax.random.uniform(ks[4], (1, H), jnp.float32, -scale, scale)
    wv = jax.random.uniform(ks[5], (H, H), jnp.float32, -scale, scale)
    bv = jax.random.uniform(ks[6], (1, H), jnp.float32, -scale, scale)
    we = jax.random.uniform(ks[7], (H, H), jnp.float32, -scale, scale)
    be = jax.random.uniform(ks[8], (1, H), jnp.float32, -scale, scale)
    params = (wu, bu, wv, bv, we, be)

    out = node_features(x, e, edge_index, params, E)
    out = jax.block_until_ready(out)

    # Pure-JAX reference (mirrors the PyTorch forward with is_pdp=False).
    def reference(x, e, idx):
        Ux = x @ wu + bu
        Vx = x @ wv + bv
        Ve = e @ we + be
        Ve = jax.nn.softmax(Ve.reshape(B, N, E, H), axis=2).reshape(B, NE, H)
        Vxg = jnp.take_along_axis(Vx, idx[:, :, None], axis=1)   # (B, NE, H)
        to = (Ve * Vxg).reshape(B, N, E, H).sum(axis=2)
        return Ux + to

    ref = reference(x, e, edge_index)
    assert out.shape == (B, N, H) and out.dtype == jnp.float32
    assert jnp.allclose(out, ref, atol=1e-4, rtol=1e-4), "mismatch vs reference"
    print("KERNEL_OK")
</pallas_src>

<mosaic_0001>
module attributes {stable_mosaic.version = 11 : i64} {
  func.func @_node_features_kernel(%arg0: i32, %arg1: memref<1x8x32xf32, #tpu.memory_space<vmem>>, %arg2: memref<1x8x128xf32, #tpu.memory_space<vmem>>, %arg3: memref<1x8x8xf32, #tpu.memory_space<vmem>>, %arg4: memref<32x32xf32, #tpu.memory_space<vmem>>, %arg5: memref<1x32xf32, #tpu.memory_space<vmem>>, %arg6: memref<32x128xf32, #tpu.memory_space<vmem>>, %arg7: memref<1x128xf32, #tpu.memory_space<vmem>>, %arg8: memref<128x128xf32, #tpu.memory_space<vmem>>, %arg9: memref<1x128xf32, #tpu.memory_space<vmem>>, %arg10: memref<8x128xf32, #tpu.memory_space<vmem>>, %arg11: memref<1x8x32xf32, #tpu.memory_space<vmem>>) attributes {dimension_semantics = [#tpu.dimension_semantics<parallel>], iteration_bounds = array<i64: 2>, scalar_prefetch = 0 : i64, scratch_operands = 0 : i64, tpu.core_type = #tpu.core_type<tc>, window_params = [{transform_indices = @transform_0, window_bounds = array<i64: 1, 8, 32>}, {transform_indices = @transform_1, window_bounds = array<i64: 1, 8, 128>}, {transform_indices = @transform_2, window_bounds = array<i64: 1, 8, 8>}, {pipeline_mode = #tpu.pipeline_mode<synchronous>, transform_indices = @transform_3, window_bounds = array<i64: 32, 32>}, {pipeline_mode = #tpu.pipeline_mode<synchronous>, transform_indices = @transform_4, window_bounds = array<i64: 1, 32>}, {pipeline_mode = #tpu.pipeline_mode<synchronous>, transform_indices = @transform_5, window_bounds = array<i64: 32, 128>}, {pipeline_mode = #tpu.pipeline_mode<synchronous>, transform_indices = @transform_6, window_bounds = array<i64: 1, 128>}, {pipeline_mode = #tpu.pipeline_mode<synchronous>, transform_indices = @transform_7, window_bounds = array<i64: 128, 128>}, {pipeline_mode = #tpu.pipeline_mode<synchronous>, transform_indices = @transform_8, window_bounds = array<i64: 1, 128>}, {pipeline_mode = #tpu.pipeline_mode<synchronous>, transform_indices = @transform_9, window_bounds = array<i64: 8, 128>}, {transform_indices = @transform_10, window_bounds = array<i64: 1, 8, 32>}]} {
    %c0 = arith.constant 0 : index
    %c0_0 = arith.constant 0 : index
    %c0_1 = arith.constant 0 : index
    %0 = vector.load %arg1[%c0, %c0_0, %c0_1] : memref<1x8x32xf32, #tpu.memory_space<vmem>>, vector<1x8x32xf32>
    %1 = vector.shape_cast %0 : vector<1x8x32xf32> to vector<8x32xf32>
    %c0_2 = arith.constant 0 : index
    %c0_3 = arith.constant 0 : index
    %c0_4 = arith.constant 0 : index
    %2 = vector.load %arg2[%c0_2, %c0_3, %c0_4] : memref<1x8x128xf32, #tpu.memory_space<vmem>>, vector<1x8x128xf32>
    %3 = vector.shape_cast %2 : vector<1x8x128xf32> to vector<8x128xf32>
    %c0_5 = arith.constant 0 : index
    %c0_6 = arith.constant 0 : index
    %c0_7 = arith.constant 0 : index
    %4 = vector.load %arg3[%c0_5, %c0_6, %c0_7] : memref<1x8x8xf32, #tpu.memory_space<vmem>>, vector<1x8x8xf32>
    %5 = vector.shape_cast %4 : vector<1x8x8xf32> to vector<8x8xf32>
    %c0_8 = arith.constant 0 : index
    %c0_9 = arith.constant 0 : index
    %6 = vector.load %arg4[%c0_8, %c0_9] : memref<32x32xf32, #tpu.memory_space<vmem>>, vector<32x32xf32>
    %cst = arith.constant dense<0.000000e+00> : vector<8x32xf32>
    %7 = tpu.matmul %1, %6, %cst {dimension_numbers = #tpu.dot_dimension_numbers<[1], [0], [0], [1], [0, 0, 1, 1], [], []>} : vector<8x32xf32>, vector<32x32xf32>, vector<8x32xf32> -> vector<8x32xf32>
    %c0_10 = arith.constant 0 : index
    %c0_11 = arith.constant 0 : index
    %8 = vector.load %arg5[%c0_10, %c0_11] : memref<1x32xf32, #tpu.memory_space<vmem>>, vector<1x32xf32>
    %9 = vector.broadcast %8 : vector<1x32xf32> to vector<8x32xf32>
    %10 = arith.addf %7, %9 : vector<8x32xf32>
    %c0_12 = arith.constant 0 : index
    %c0_13 = arith.constant 0 : index
    %11 = vector.load %arg6[%c0_12, %c0_13] : memref<32x128xf32, #tpu.memory_space<vmem>>, vector<32x128xf32>
    %cst_14 = arith.constant dense<0.000000e+00> : vector<8x128xf32>
    %12 = tpu.matmul %1, %11, %cst_14 {dimension_numbers = #tpu.dot_dimension_numbers<[1], [0], [0], [1], [0, 0, 1, 1], [], []>} : vector<8x32xf32>, vector<32x128xf32>, vector<8x128xf32> -> vector<8x128xf32>
    %c0_15 = arith.constant 0 : index
    %c0_16 = arith.constant 0 : index
    %13 = vector.load %arg7[%c0_15, %c0_16] : memref<1x128xf32, #tpu.memory_space<vmem>>, vector<1x128xf32>
    %14 = vector.broadcast %13 : vector<1x128xf32> to vector<8x128xf32>
    %15 = arith.addf %12, %14 : vector<8x128xf32>
    %c0_17 = arith.constant 0 : index
    %c0_18 = arith.constant 0 : index
    %16 = vector.load %arg8[%c0_17, %c0_18] : memref<128x128xf32, #tpu.memory_space<vmem>>, vector<128x128xf32>
    %cst_19 = arith.constant dense<0.000000e+00> : vector<8x128xf32>
    %17 = tpu.matmul %3, %16, %cst_19 {dimension_numbers = #tpu.dot_dimension_numbers<[1], [0], [0], [1], [0, 0, 1, 1], [], []>} : vector<8x128xf32>, vector<128x128xf32>, vector<8x128xf32> -> vector<8x128xf32>
    %c0_20 = arith.constant 0 : index
    %c0_21 = arith.constant 0 : index
    %18 = vector.load %arg9[%c0_20, %c0_21] : memref<1x128xf32, #tpu.memory_space<vmem>>, vector<1x128xf32>
    %19 = vector.broadcast %18 : vector<1x128xf32> to vector<8x128xf32>
    %20 = arith.addf %17, %19 : vector<8x128xf32>
    %c32_i32 = arith.constant 32 : i32
    %21 = tpu.dynamic_rotate %20 by %c32_i32 dim 1 : vector<8x128xf32>, i32 -> vector<8x128xf32>
    %22 = arith.maximumf %20, %21 : vector<8x128xf32>
    %c64_i32 = arith.constant 64 : i32
    %23 = tpu.dynamic_rotate %22 by %c64_i32 dim 1 : vector<8x128xf32>, i32 -> vector<8x128xf32>
    %24 = arith.maximumf %22, %23 : vector<8x128xf32>
    %25 = arith.subf %20, %24 : vector<8x128xf32>
    %26 = math.exp %25 : vector<8x128xf32>
    %c32_i32_22 = arith.constant 32 : i32
    %27 = tpu.dynamic_rotate %26 by %c32_i32_22 dim 1 : vector<8x128xf32>, i32 -> vector<8x128xf32>
    %28 = arith.addf %26, %27 : vector<8x128xf32>
    %c64_i32_23 = arith.constant 64 : i32
    %29 = tpu.dynamic_rotate %28 by %c64_i32_23 dim 1 : vector<8x128xf32>, i32 -> vector<8x128xf32>
    %30 = arith.addf %28, %29 : vector<8x128xf32>
    %c0_24 = arith.constant 0 : index
    %c0_25 = arith.constant 0 : index
    %31 = vector.load %arg10[%c0_24, %c0_25] : memref<8x128xf32, #tpu.memory_space<vmem>>, vector<8x128xf32>
    %cst_26 = arith.constant dense<0.000000e+00> : vector<8x128xf32>
    %32 = tpu.matmul %5, %31, %cst_26 {dimension_numbers = #tpu.dot_dimension_numbers<[1], [0], [0], [1], [0, 0, 1, 1], [], []>} : vector<8x8xf32>, vector<8x128xf32>, vector<8x128xf32> -> vector<8x128xf32>
    %33 = vector.shape_cast %32 : vector<8x128xf32> to vector<1x8x128xf32>
    %34 = vector.shape_cast %15 : vector<8x128xf32> to vector<1x8x128xf32>
    %cst_27 = arith.constant 0.000000e+00 : f32
    %35 = vector.broadcast %cst_27 : f32 to vector<1x8x128xf32>
    %36 = arith.cmpf oeq, %33, %35 : vector<1x8x128xf32>
    %37 = arith.extui %36 : vector<1x8x128xi1> to vector<1x8x128xi32>
    %38 = arith.sitofp %37 : vector<1x8x128xi32> to vector<1x8x128xf32>
    %39 = vector.extract_strided_slice %34 {offsets = [0, 0, 0], sizes = [1, 1, 128], strides = [1, 1, 1]} : vector<1x8x128xf32> to vector<1x1x128xf32>
    %40 = vector.broadcast %39 : vector<1x1x128xf32> to vector<1x8x128xf32>
    %41 = arith.mulf %38, %40 : vector<1x8x128xf32>
    %cst_28 = arith.constant 1.000000e+00 : f32
    %42 = vector.broadcast %cst_28 : f32 to vector<1x8x128xf32>
    %43 = arith.cmpf oeq, %33, %42 : vector<1x8x128xf32>
    %44 = arith.extui %43 : vector<1x8x128xi1> to vector<1x8x128xi32>
    %45 = arith.sitofp %44 : vector<1x8x128xi32> to vector<1x8x128xf32>
    %46 = vector.extract_strided_slice %34 {offsets = [0, 1, 0], sizes = [1, 1, 128], strides = [1, 1, 1]} : vector<1x8x128xf32> to vector<1x1x128xf32>
    %47 = vector.broadcast %46 : vector<1x1x128xf32> to vector<1x8x128xf32>
    %48 = arith.mulf %45, %47 : vector<1x8x128xf32>
    %cst_29 = arith.constant 2.000000e+00 : f32
    %49 = vector.broadcast %cst_29 : f32 to vector<1x8x128xf32>
    %50 = arith.cmpf oeq, %33, %49 : vector<1x8x128xf32>
    %51 = arith.extui %50 : vector<1x8x128xi1> to vector<1x8x128xi32>
    %52 = arith.sitofp %51 : vector<1x8x128xi32> to vector<1x8x128xf32>
    %53 = vector.extract_strided_slice %34 {offsets = [0, 2, 0], sizes = [1, 1, 128], strides = [1, 1, 1]} : vector<1x8x128xf32> to vector<1x1x128xf32>
    %54 = vector.broadcast %53 : vector<1x1x128xf32> to vector<1x8x128xf32>
    %55 = arith.mulf %52, %54 : vector<1x8x128xf32>
    %cst_30 = arith.constant 3.000000e+00 : f32
    %56 = vector.broadcast %cst_30 : f32 to vector<1x8x128xf32>
    %57 = arith.cmpf oeq, %33, %56 : vector<1x8x128xf32>
    %58 = arith.extui %57 : vector<1x8x128xi1> to vector<1x8x128xi32>
    %59 = arith.sitofp %58 : vector<1x8x128xi32> to vector<1x8x128xf32>
    %60 = vector.extract_strided_slice %34 {offsets = [0, 3, 0], sizes = [1, 1, 128], strides = [1, 1, 1]} : vector<1x8x128xf32> to vector<1x1x128xf32>
    %61 = vector.broadcast %60 : vector<1x1x128xf32> to vector<1x8x128xf32>
    %62 = arith.mulf %59, %61 : vector<1x8x128xf32>
    %cst_31 = arith.constant 4.000000e+00 : f32
    %63 = vector.broadcast %cst_31 : f32 to vector<1x8x128xf32>
    %64 = arith.cmpf oeq, %33, %63 : vector<1x8x128xf32>
    %65 = arith.extui %64 : vector<1x8x128xi1> to vector<1x8x128xi32>
    %66 = arith.sitofp %65 : vector<1x8x128xi32> to vector<1x8x128xf32>
    %67 = vector.extract_strided_slice %34 {offsets = [0, 4, 0], sizes = [1, 1, 128], strides = [1, 1, 1]} : vector<1x8x128xf32> to vector<1x1x128xf32>
    %68 = vector.broadcast %67 : vector<1x1x128xf32> to vector<1x8x128xf32>
    %69 = arith.mulf %66, %68 : vector<1x8x128xf32>
    %cst_32 = arith.constant 5.000000e+00 : f32
    %70 = vector.broadcast %cst_32 : f32 to vector<1x8x128xf32>
    %71 = arith.cmpf oeq, %33, %70 : vector<1x8x128xf32>
    %72 = arith.extui %71 : vector<1x8x128xi1> to vector<1x8x128xi32>
    %73 = arith.sitofp %72 : vector<1x8x128xi32> to vector<1x8x128xf32>
    %74 = vector.extract_strided_slice %34 {offsets = [0, 5, 0], sizes = [1, 1, 128], strides = [1, 1, 1]} : vector<1x8x128xf32> to vector<1x1x128xf32>
    %75 = vector.broadcast %74 : vector<1x1x128xf32> to vector<1x8x128xf32>
    %76 = arith.mulf %73, %75 : vector<1x8x128xf32>
    %cst_33 = arith.constant 6.000000e+00 : f32
    %77 = vector.broadcast %cst_33 : f32 to vector<1x8x128xf32>
    %78 = arith.cmpf oeq, %33, %77 : vector<1x8x128xf32>
    %79 = arith.extui %78 : vector<1x8x128xi1> to vector<1x8x128xi32>
    %80 = arith.sitofp %79 : vector<1x8x128xi32> to vector<1x8x128xf32>
    %81 = vector.extract_strided_slice %34 {offsets = [0, 6, 0], sizes = [1, 1, 128], strides = [1, 1, 1]} : vector<1x8x128xf32> to vector<1x1x128xf32>
    %82 = vector.broadcast %81 : vector<1x1x128xf32> to vector<1x8x128xf32>
    %83 = arith.mulf %80, %82 : vector<1x8x128xf32>
    %cst_34 = arith.constant 7.000000e+00 : f32
    %84 = vector.broadcast %cst_34 : f32 to vector<1x8x128xf32>
    %85 = arith.cmpf oeq, %33, %84 : vector<1x8x128xf32>
    %86 = arith.extui %85 : vector<1x8x128xi1> to vector<1x8x128xi32>
    %87 = arith.sitofp %86 : vector<1x8x128xi32> to vector<1x8x128xf32>
    %88 = vector.extract_strided_slice %34 {offsets = [0, 7, 0], sizes = [1, 1, 128], strides = [1, 1, 1]} : vector<1x8x128xf32> to vector<1x1x128xf32>
    %89 = vector.broadcast %88 : vector<1x1x128xf32> to vector<1x8x128xf32>
    %90 = arith.mulf %87, %89 : vector<1x8x128xf32>
    %91 = arith.addf %41, %48 : vector<1x8x128xf32>
    %92 = arith.addf %55, %62 : vector<1x8x128xf32>
    %93 = arith.addf %69, %76 : vector<1x8x128xf32>
    %94 = arith.addf %83, %90 : vector<1x8x128xf32>
    %95 = arith.addf %91, %92 : vector<1x8x128xf32>
    %96 = arith.addf %93, %94 : vector<1x8x128xf32>
    %97 = arith.addf %95, %96 : vector<1x8x128xf32>
    %98 = vector.shape_cast %97 : vector<1x8x128xf32> to vector<8x128xf32>
    %99 = arith.mulf %26, %98 : vector<8x128xf32>
    %c32_i32_35 = arith.constant 32 : i32
    %100 = tpu.dynamic_rotate %99 by %c32_i32_35 dim 1 : vector<8x128xf32>, i32 -> vector<8x128xf32>
    %101 = arith.addf %99, %100 : vector<8x128xf32>
    %c64_i32_36 = arith.constant 64 : i32
    %102 = tpu.dynamic_rotate %101 by %c64_i32_36 dim 1 : vector<8x128xf32>, i32 -> vector<8x128xf32>
    %103 = arith.addf %101, %102 : vector<8x128xf32>
    %104 = vector.extract_strided_slice %30 {offsets = [0, 0], sizes = [8, 32], strides = [1, 1]} : vector<8x128xf32> to vector<8x32xf32>
    %105 = tpu.reciprocal %104 : vector<8x32xf32> -> vector<8x32xf32>
    %106 = vector.extract_strided_slice %103 {offsets = [0, 0], sizes = [8, 32], strides = [1, 1]} : vector<8x128xf32> to vector<8x32xf32>
    %107 = arith.mulf %106, %105 : vector<8x32xf32>
    %108 = arith.addf %10, %107 : vector<8x32xf32>
    %109 = vector.shape_cast %108 : vector<8x32xf32> to vector<1x8x32xf32>
    %c0_37 = arith.constant 0 : index
    %c0_38 = arith.constant 0 : index
    %c0_39 = arith.constant 0 : index
    %110 = vector.load %arg11[%c0_37, %c0_38, %c0_39] : memref<1x8x32xf32, #tpu.memory_space<vmem>>, vector<1x8x32xf32>
    tpu.vector_store %arg11[%c0_37, %c0_38, %c0_39], %109 {strides = array<i32>} : memref<1x8x32xf32, #tpu.memory_space<vmem>>, vector<1x8x32xf32>,
    return
  }
  func.func @transform_0(%arg0: i32) -> (i32, i32, i32) {
    %c0_i32 = arith.constant 0 : i32
    %c0_i32_0 = arith.constant 0 : i32
    %c0_i32_1 = arith.constant 0 : i32
    return %arg0, %c0_i32, %c0_i32_0 : i32, i32, i32
  }
  func.func @transform_1(%arg0: i32) -> (i32, i32, i32) {
    %c0_i32 = arith.constant 0 : i32
    %c0_i32_0 = arith.constant 0 : i32
    %c0_i32_1 = arith.constant 0 : i32
    return %arg0, %c0_i32, %c0_i32_0 : i32, i32, i32
  }
  func.func @transform_2(%arg0: i32) -> (i32, i32, i32) {
    %c0_i32 = arith.constant 0 : i32
    %c0_i32_0 = arith.constant 0 : i32
    %c0_i32_1 = arith.constant 0 : i32
    return %arg0, %c0_i32, %c0_i32_0 : i32, i32, i32
  }
  func.func @transform_3(%arg0: i32) -> (i32, i32) {
    %c0_i32 = arith.constant 0 : i32
    %c0_i32_0 = arith.constant 0 : i32
    %c0_i32_1 = arith.constant 0 : i32
    return %c0_i32, %c0_i32_0 : i32, i32
  }
  func.func @transform_4(%arg0: i32) -> (i32, i32) {
    %c0_i32 = arith.constant 0 : i32
    %c0_i32_0 = arith.constant 0 : i32
    %c0_i32_1 = arith.constant 0 : i32
    return %c0_i32, %c0_i32_0 : i32, i32
  }
  func.func @transform_5(%arg0: i32) -> (i32, i32) {
    %c0_i32 = arith.constant 0 : i32
    %c0_i32_0 = arith.constant 0 : i32
    %c0_i32_1 = arith.constant 0 : i32
    return %c0_i32, %c0_i32_0 : i32, i32
  }
  func.func @transform_6(%arg0: i32) -> (i32, i32) {
    %c0_i32 = arith.constant 0 : i32
    %c0_i32_0 = arith.constant 0 : i32
    %c0_i32_1 = arith.constant 0 : i32
    return %c0_i32, %c0_i32_0 : i32, i32
  }
  func.func @transform_7(%arg0: i32) -> (i32, i32) {
    %c0_i32 = arith.constant 0 : i32
    %c0_i32_0 = arith.constant 0 : i32
    %c0_i32_1 = arith.constant 0 : i32
    return %c0_i32, %c0_i32_0 : i32, i32
  }
  func.func @transform_8(%arg0: i32) -> (i32, i32) {
    %c0_i32 = arith.constant 0 : i32
    %c0_i32_0 = arith.constant 0 : i32
    %c0_i32_1 = arith.constant 0 : i32
    return %c0_i32, %c0_i32_0 : i32, i32
  }
  func.func @transform_9(%arg0: i32) -> (i32, i32) {
    %c0_i32 = arith.constant 0 : i32
    %c0_i32_0 = arith.constant 0 : i32
    %c0_i32_1 = arith.constant 0 : i32
    return %c0_i32, %c0_i32_0 : i32, i32
  }
  func.func @transform_10(%arg0: i32) -> (i32, i32, i32) {
    %c0_i32 = arith.constant 0 : i32
    %c0_i32_0 = arith.constant 0 : i32
    %c0_i32_1 = arith.constant 0 : i32
    return %arg0, %c0_i32, %c0_i32_0 : i32, i32, i32
  }
}

</mosaic_0001>

<llo_original>
// kernel: tpu_custom_call.1
$region0: #{tpu_custom_call.1}
  #allocation0 [shape = 'u32[]', space=smem, size = 0x4, offset = 0x4, fixed_abs, tag = 'smem constant byte address 0x4 - core index']
  #allocation1 [shape = 'u32[72,128]{1,0:T(1,128)}', space=vmem, size = 0x9000, scoped, tag = 'internal scratch']
  %s0 = inlined_call_operand.hbm [shape: f32[2,8,32], index: 0, kind: input, shape index: {}]
  %s1 = inlined_call_operand.hbm [shape: f32[2,8,128], index: 1, kind: input, shape index: {}]
  %s2 = inlined_call_operand.hbm [shape: f32[2,8,8], index: 2, kind: input, shape index: {}]
  %s3 = inlined_call_operand.hbm [shape: f32[32,32], index: 3, kind: input, shape index: {}]
  %s4 = inlined_call_operand.hbm [shape: f32[1,32], index: 4, kind: input, shape index: {}]
  %s5 = inlined_call_operand.hbm [shape: f32[32,128], index: 5, kind: input, shape index: {}]
  %s6 = inlined_call_operand.hbm [shape: f32[1,128], index: 6, kind: input, shape index: {}]
  %s7 = inlined_call_operand.hbm [shape: f32[128,128], index: 7, kind: input, shape index: {}]
  %s8 = inlined_call_operand.hbm [shape: f32[1,128], index: 8, kind: input, shape index: {}]
  %s9 = inlined_call_operand.vmem [shape: f32[8,128], index: 9, kind: input, shape index: {}]
  %s10 = inlined_call_operand.hbm [shape: f32[2,8,32], index: 10, kind: output, shape index: {}]
  %s11 = sld [smem:[#allocation0]]
  $region109: #{tpu_custom_call.1} parent=0
    _
  %s13 = ssub.s32 1, %s11
  %s14 = scalar_select 0, %s13, %s11
  $region1: #{tpu_custom_call.1} parent=0
    #allocation2 [shape = 'u8[8192]{0}', space=vmem, size = 0x2000, scoped, tag = 'input window, operand 0']
    #allocation3 [shape = 's32[2]{0}', space=sflag, size = 0x8, scoped, tag = 'scoped memory for tpu_custom_call.1']
    #allocation4 [shape = 's32[2]{0}', space=sflag, size = 0x8, scoped, tag = 'scoped memory for tpu_custom_call.1']
    #allocation5 [shape = 'u8[8192]{0}', space=vmem, size = 0x2000, scoped, tag = 'input window, operand 1']
    #allocation6 [shape = 's32[2]{0}', space=sflag, size = 0x8, scoped, tag = 'scoped memory for tpu_custom_call.1']
    #allocation7 [shape = 'u8[8192]{0}', space=vmem, size = 0x2000, scoped, tag = 'input window, operand 2']
    #allocation8 [shape = 'u8[16384]{0}', space=vmem, size = 0x4000, scoped, tag = 'input window, operand 3, single buffered']
    #allocation9 [shape = 's32[1]{0}', space=sflag, size = 0x4, scoped, tag = 'scoped memory for tpu_custom_call.1']
    #allocation10 [shape = 'u8[512]{0}', space=vmem, size = 0x400, scoped, tag = 'input window, operand 4, single buffered']
    #allocation11 [shape = 'u8[16384]{0}', space=vmem, size = 0x4000, scoped, tag = 'input window, operand 5, single buffered']
    #allocation12 [shape = 's32[1]{0}', space=sflag, size = 0x4, scoped, tag = 'scoped memory for tpu_custom_call.1']
    #allocation13 [shape = 'u8[512]{0}', space=vmem, size = 0x400, scoped, tag = 'input window, operand 6, single buffered']
    #allocation14 [shape = 'u8[65536]{0}', space=vmem, size = 0x10000, scoped, tag = 'input window, operand 7, single buffered']
    #allocation15 [shape = 's32[1]{0}', space=sflag, size = 0x4, scoped, tag = 'scoped memory for tpu_custom_call.1']
    #allocation16 [shape = 'u8[512]{0}', space=vmem, size = 0x400, scoped, tag = 'input window, operand 8, single buffered']
    #allocation17 [shape = 'u8[8192]{0}', space=vmem, size = 0x2000, scoped, tag = 'output window, operand 0']
    %15 = vsyncpa [#allocation3], 0
    %s16 = scalar_lea.sflag [#allocation3], 1
    %17 = vsyncpa %s16, 0
    %18 = vsyncpa [#allocation6], 0
    %s19 = scalar_lea.sflag [#allocation6], 1
    %20 = vsyncpa %s19, 0
    %21 = vsyncpa [#allocation9], 0
    %22 = vsyncpa [#allocation12], 0
    %23 = vsyncpa [#allocation15], 0
    %24 = vsyncpa [#allocation4], 0
    %s25 = scalar_lea.sflag [#allocation4], 1
    %26 = vsyncpa %s25, 0
    loop: start=0, step=1, limit=4
    $region2: #{tpu_custom_call.1} parent=1 // loop_pre_header
      _
    $region3: #{tpu_custom_call.1} parent=1 // loop_header
      %s28 = sphi 0, %s32
      %p29 = scmp.ge.s32.totalorder %s28, 4
      %s38 = sphi 0, %s40
      %s41 = sphi 0, %s38
      %s42 = sphi 0, %s41
      %s58 = sphi 0, %s42
      %s64 = sphi 0, %s66
      %s67 = sphi 0, %s64
      %s68 = sphi 0, %s67
      %s84 = sphi 0, %s68
      %s90 = sphi 0, %s92
      %s93 = sphi 0, %s90
      %s94 = sphi 0, %s93
      %s110 = sphi 0, %s94
      %s114 = sphi 0, %s114
      %s116 = sphi 0, %s114
      %s117 = sphi 0, %s116
      %s131 = sphi 0, %s117
      %s135 = sphi 0, %s135
      %s137 = sphi 0, %s135
      %s138 = sphi 0, %s137
      %s152 = sphi 0, %s138
      %s156 = sphi 0, %s156
      %s158 = sphi 0, %s156
      %s159 = sphi 0, %s158
      %s173 = sphi 0, %s159
      %s177 = sphi 0, %s177
      %s179 = sphi 0, %s177
      %s180 = sphi 0, %s179
      %s194 = sphi 0, %s180
      %s198 = sphi 0, %s198
      %s200 = sphi 0, %s198
      %s201 = sphi 0, %s200
      %s215 = sphi 0, %s201
      %s219 = sphi 0, %s219
      %s221 = sphi 0, %s219
      %s222 = sphi 0, %s221
      %s236 = sphi 0, %s222
      %s240 = sphi 0, %s240
      %s242 = sphi 0, %s240
      %s243 = sphi 0, %s242
      %s257 = sphi 0, %s243
      %s263 = sphi 0, %s265
      %s266 = sphi 0, %s263
      %s267 = sphi 0, %s266
      %s283 = sphi 0, %s267
    $region4: #{tpu_custom_call.1} parent=1 // loop_header_branch
      %31 = sbr.rel (%p29) target = $region8
    $region5: #{tpu_custom_call.1} parent=1 // loop_body
      %s33 = ssub.s32 %s28, 1
      %s34 = ssub.s32 %s28, 2
      %s35 = sadd.s32 %s28, 1
      %s36 = ssub.s32 %s28, %s35
      %p37 = scmp.eq.s32.totalorder %s36, 0
      %s39 = sadd.s32 %s38, 1
      %s40 = scalar_select %p37, %s38, %s39
      %p43 = pneg %p37
      %p44 = scmp.eq.s32.totalorder %s28, 1
      %p45 = por %p43, %p44
      %p46 = scmp.ne.s32.totalorder %s38, %s41
      %p47 = scmp.eq.s32.totalorder %s28, 0
      %p48 = por %p46, %p47
      %p49 = scmp.ne.s32.totalorder %s38, %s41
      %p50 = scmp.eq.s32.totalorder %s33, 1
      %p51 = por %p49, %p50
      %p52 = scmp.ne.s32.totalorder %s41, %s42
      %p53 = scmp.eq.s32.totalorder %s33, 0
      %p54 = por %p52, %p53
      %p55 = scmp.ne.s32.totalorder %s41, %s42
      %p56 = scmp.eq.s32.totalorder %s34, 1
      %p57 = por %p55, %p56
      %p59 = scmp.ne.s32.totalorder %s42, %s58
      %p60 = scmp.eq.s32.totalorder %s34, 0
      %p61 = por %p59, %p60
      %s62 = ssub.s32 %s28, %s35
      %p63 = scmp.eq.s32.totalorder %s62, 0
      %s65 = sadd.s32 %s64, 1
      %s66 = scalar_select %p63, %s64, %s65
      %p69 = pneg %p63
      %p70 = scmp.eq.s32.totalorder %s28, 1
      %p71 = por %p69, %p70
      %p72 = scmp.ne.s32.totalorder %s64, %s67
      %p73 = scmp.eq.s32.totalorder %s28, 0
      %p74 = por %p72, %p73
      %p75 = scmp.ne.s32.totalorder %s64, %s67
      %p76 = scmp.eq.s32.totalorder %s33, 1
      %p77 = por %p75, %p76
      %p78 = scmp.ne.s32.totalorder %s67, %s68
      %p79 = scmp.eq.s32.totalorder %s33, 0
      %p80 = por %p78, %p79
      %p81 = scmp.ne.s32.totalorder %s67, %s68
      %p82 = scmp.eq.s32.totalorder %s34, 1
      %p83 = por %p81, %p82
      %p85 = scmp.ne.s32.totalorder %s68, %s84
      %p86 = scmp.eq.s32.totalorder %s34, 0
      %p87 = por %p85, %p86
      %s88 = ssub.s32 %s28, %s35
      %p89 = scmp.eq.s32.totalorder %s88, 0
      %s91 = sadd.s32 %s90, 1
      %s92 = scalar_select %p89, %s90, %s91
      %p95 = pneg %p89
      %p96 = scmp.eq.s32.totalorder %s28, 1
      %p97 = por %p95, %p96
      %p98 = scmp.ne.s32.totalorder %s90, %s93
      %p99 = scmp.eq.s32.totalorder %s28, 0
      %p100 = por %p98, %p99
      %p101 = scmp.ne.s32.totalorder %s90, %s93
      %p102 = scmp.eq.s32.totalorder %s33, 1
      %p103 = por %p101, %p102
      %p104 = scmp.ne.s32.totalorder %s93, %s94
      %p105 = scmp.eq.s32.totalorder %s33, 0
      %p106 = por %p104, %p105
      %p107 = scmp.ne.s32.totalorder %s93, %s94
      %p108 = scmp.eq.s32.totalorder %s34, 1
      %p109 = por %p107, %p108
      %p111 = scmp.ne.s32.totalorder %s94, %s110
      %p112 = scmp.eq.s32.totalorder %s34, 0
      %p113 = por %p111, %p112
      %s115 = sadd.s32 %s114, 1
      %p118 = scmp.eq.s32.totalorder %s28, 1
      %p119 = scmp.ne.s32.totalorder %s114, %s116
      %p120 = scmp.eq.s32.totalorder %s28, 0
      %p121 = por %p119, %p120
      %p122 = scmp.ne.s32.totalorder %s114, %s116
      %p123 = scmp.eq.s32.totalorder %s33, 1
      %p124 = por %p122, %p123
      %p125 = scmp.ne.s32.totalorder %s116, %s117
      %p126 = scmp.eq.s32.totalorder %s33, 0
      %p127 = por %p125, %p126
      %p128 = scmp.ne.s32.totalorder %s116, %s117
      %p129 = scmp.eq.s32.totalorder %s34, 1
      %p130 = por %p128, %p129
      %p132 = scmp.ne.s32.totalorder %s117, %s131
      %p133 = scmp.eq.s32.totalorder %s34, 0
      %p134 = por %p132, %p133
      %s136 = sadd.s32 %s135, 1
      %p139 = scmp.eq.s32.totalorder %s28, 1
      %p140 = scmp.ne.s32.totalorder %s135, %s137
      %p141 = scmp.eq.s32.totalorder %s28, 0
      %p142 = por %p140, %p141
      %p143 = scmp.ne.s32.totalorder %s135, %s137
      %p144 = scmp.eq.s32.totalorder %s33, 1
      %p145 = por %p143, %p144
      %p146 = scmp.ne.s32.totalorder %s137, %s138
      %p147 = scmp.eq.s32.totalorder %s33, 0
      %p148 = por %p146, %p147
      %p149 = scmp.ne.s32.totalorder %s137, %s138
      %p150 = scmp.eq.s32.totalorder %s34, 1
      %p151 = por %p149, %p150
      %p153 = scmp.ne.s32.totalorder %s138, %s152
      %p154 = scmp.eq.s32.totalorder %s34, 0
      %p155 = por %p153, %p154
      %s157 = sadd.s32 %s156, 1
      %p160 = scmp.eq.s32.totalorder %s28, 1
      %p161 = scmp.ne.s32.totalorder %s156, %s158
      %p162 = scmp.eq.s32.totalorder %s28, 0
      %p163 = por %p161, %p162
      %p164 = scmp.ne.s32.totalorder %s156, %s158
      %p165 = scmp.eq.s32.totalorder %s33, 1
      %p166 = por %p164, %p165
      %p167 = scmp.ne.s32.totalorder %s158, %s159
      %p168 = scmp.eq.s32.totalorder %s33, 0
      %p169 = por %p167, %p168
      %p170 = scmp.ne.s32.totalorder %s158, %s159
      %p171 = scmp.eq.s32.totalorder %s34, 1
      %p172 = por %p170, %p171
      %p174 = scmp.ne.s32.totalorder %s159, %s173
      %p175 = scmp.eq.s32.totalorder %s34, 0
      %p176 = por %p174, %p175
      %s178 = sadd.s32 %s177, 1
      %p181 = scmp.eq.s32.totalorder %s28, 1
      %p182 = scmp.ne.s32.totalorder %s177, %s179
      %p183 = scmp.eq.s32.totalorder %s28, 0
      %p184 = por %p182, %p183
      %p185 = scmp.ne.s32.totalorder %s177, %s179
      %p186 = scmp.eq.s32.totalorder %s33, 1
      %p187 = por %p185, %p186
      %p188 = scmp.ne.s32.totalorder %s179, %s180
      %p189 = scmp.eq.s32.totalorder %s33, 0
      %p190 = por %p188, %p189
      %p191 = scmp.ne.s32.totalorder %s179, %s180
      %p192 = scmp.eq.s32.totalorder %s34, 1
      %p193 = por %p191, %p192
      %p195 = scmp.ne.s32.totalorder %s180, %s194
      %p196 = scmp.eq.s32.totalorder %s34, 0
      %p197 = por %p195, %p196
      %s199 = sadd.s32 %s198, 1
      %p202 = scmp.eq.s32.totalorder %s28, 1
      %p203 = scmp.ne.s32.totalorder %s198, %s200
      %p204 = scmp.eq.s32.totalorder %s28, 0
      %p205 = por %p203, %p204
      %p206 = scmp.ne.s32.totalorder %s198, %s200
      %p207 = scmp.eq.s32.totalorder %s33, 1
      %p208 = por %p206, %p207
      %p209 = scmp.ne.s32.totalorder %s200, %s201
      %p210 = scmp.eq.s32.totalorder %s33, 0
      %p211 = por %p209, %p210
      %p212 = scmp.ne.s32.totalorder %s200, %s201
      %p213 = scmp.eq.s32.totalorder %s34, 1
      %p214 = por %p212, %p213
      %p216 = scmp.ne.s32.totalorder %s201, %s215
      %p217 = scmp.eq.s32.totalorder %s34, 0
      %p218 = por %p216, %p217
      %s220 = sadd.s32 %s219, 1
      %p223 = scmp.eq.s32.totalorder %s28, 1
      %p224 = scmp.ne.s32.totalorder %s219, %s221
      %p225 = scmp.eq.s32.totalorder %s28, 0
      %p226 = por %p224, %p225
      %p227 = scmp.ne.s32.totalorder %s219, %s221
      %p228 = scmp.eq.s32.totalorder %s33, 1
      %p229 = por %p227, %p228
      %p230 = scmp.ne.s32.totalorder %s221, %s222
      %p231 = scmp.eq.s32.totalorder %s33, 0
      %p232 = por %p230, %p231
      %p233 = scmp.ne.s32.totalorder %s221, %s222
      %p234 = scmp.eq.s32.totalorder %s34, 1
      %p235 = por %p233, %p234
      %p237 = scmp.ne.s32.totalorder %s222, %s236
      %p238 = scmp.eq.s32.totalorder %s34, 0
      %p239 = por %p237, %p238
      %s241 = sadd.s32 %s240, 1
      %p244 = scmp.eq.s32.totalorder %s28, 1
      %p245 = scmp.ne.s32.totalorder %s240, %s242
      %p246 = scmp.eq.s32.totalorder %s28, 0
      %p247 = por %p245, %p246
      %p248 = scmp.ne.s32.totalorder %s240, %s242
      %p249 = scmp.eq.s32.totalorder %s33, 1
      %p250 = por %p248, %p249
      %p251 = scmp.ne.s32.totalorder %s242, %s243
      %p252 = scmp.eq.s32.totalorder %s33, 0
      %p253 = por %p251, %p252
      %p254 = scmp.ne.s32.totalorder %s242, %s243
      %p255 = scmp.eq.s32.totalorder %s34, 1
      %p256 = por %p254, %p255
      %p258 = scmp.ne.s32.totalorder %s243, %s257
      %p259 = scmp.eq.s32.totalorder %s34, 0
      %p260 = por %p258, %p259
      %s261 = ssub.s32 %s28, %s35
      %p262 = scmp.eq.s32.totalorder %s261, 0
      %s264 = sadd.s32 %s263, 1
      %s265 = scalar_select %p262, %s263, %s264
      %p268 = pneg %p262
      %p269 = scmp.eq.s32.totalorder %s28, 1
      %p270 = por %p268, %p269
      %p271 = scmp.ne.s32.totalorder %s263, %s266
      %p272 = scmp.eq.s32.totalorder %s28, 0
      %p273 = por %p271, %p272
      %p274 = scmp.ne.s32.totalorder %s263, %s266
      %p275 = scmp.eq.s32.totalorder %s33, 1
      %p276 = por %p274, %p275
      %p277 = scmp.ne.s32.totalorder %s266, %s267
      %p278 = scmp.eq.s32.totalorder %s33, 0
      %p279 = por %p277, %p278
      %p280 = scmp.ne.s32.totalorder %s266, %s267
      %p281 = scmp.eq.s32.totalorder %s34, 1
      %p282 = por %p280, %p281
      %p284 = scmp.ne.s32.totalorder %s267, %s283
      %p285 = scmp.eq.s32.totalorder %s34, 0
      %p286 = por %p284, %p285
      %p287 = scmp.le.s32.totalorder 1, %s28
      %p288 = scmp.lt.s32.totalorder %s28, 3
      %p289 = pnand %p287, %p288
      %p290 = pneg %p289
      // Predicated region
      $region9: #{tpu_custom_call.1} parent=5 // pred_check
        _
      $region10: #{tpu_custom_call.1} parent=5 // pred_check_branch
        %292 = sbr.rel (%p289) target = $region12
      $region11: #{tpu_custom_call.1} parent=5 // pred_region
        %s293 = ssub.s32 %s28, 1
        // Predicated region
        $region13: #{tpu_custom_call.1} parent=11 // pred_check
          %p294 = pneg %p127
        $region14: #{tpu_custom_call.1} parent=11 // pred_check_branch
          %296 = sbr.rel (%p294) target = $region16
        $region15: #{tpu_custom_call.1} parent=11 // pred_region
          %298 = vsyncadd [#allocation9], 0
          %s299 = sshll.u32 %s3, 4
          %s300 = int_to_ptr.hbm [resolvable:$true] %s299
          %s301 = sshll.u32 [#allocation8], 4
          %s302 = int_to_ptr.vmem [resolvable:$true] %s301
          %307 = dma.hbm_to_vmem [thread:$0]  %s300, 512, %s302, [#allocation9], 128, 128, 8
        $region16: #{tpu_custom_call.1} parent=11 // pred_fallthru
          _
        // Predicated region
        $region17: #{tpu_custom_call.1} parent=11 // pred_check
          %p308 = pneg %p148
        $region18: #{tpu_custom_call.1} parent=11 // pred_check_branch
          %310 = sbr.rel (%p308) target = $region20
        $region19: #{tpu_custom_call.1} parent=11 // pred_region
          %312 = vsyncadd [#allocation9], 0
          %s314 = sshll.u32 %s4, 4
          %s315 = int_to_ptr.hbm [resolvable:$true] %s314
          %s316 = sshll.u32 [#allocation10], 4
          %s317 = int_to_ptr.vmem [resolvable:$true] %s316
          %319 = dma.hbm_to_vmem [thread:$0]  %s315, 16, %s317, [#allocation9]
        $region20: #{tpu_custom_call.1} parent=11 // pred_fallthru
          _
        // Predicated region
        $region21: #{tpu_custom_call.1} parent=11 // pred_check
          %p320 = pneg %p169
        $region22: #{tpu_custom_call.1} parent=11 // pred_check_branch
          %322 = sbr.rel (%p320) target = $region24
        $region23: #{tpu_custom_call.1} parent=11 // pred_region
          %324 = vsyncadd [#allocation12], 0
          %s325 = sshll.u32 %s5, 4
          %s326 = int_to_ptr.hbm [resolvable:$true] %s325
          %s327 = sshll.u32 [#allocation11], 4
          %s328 = int_to_ptr.vmem [resolvable:$true] %s327
          %333 = dma.hbm_to_vmem [thread:$0]  %s326, 512, %s328, [#allocation12], 128, 128, 8
        $region24: #{tpu_custom_call.1} parent=11 // pred_fallthru
          _
        // Predicated region
        $region25: #{tpu_custom_call.1} parent=11 // pred_check
          %p334 = pneg %p190
        $region26: #{tpu_custom_call.1} parent=11 // pred_check_branch
          %336 = sbr.rel (%p334) target = $region28
        $region27: #{tpu_custom_call.1} parent=11 // pred_region
          %338 = vsyncadd [#allocation12], 0
          %s340 = sshll.u32 %s6, 4
          %s341 = int_to_ptr.hbm [resolvable:$true] %s340
          %s342 = sshll.u32 [#allocation13], 4
          %s343 = int_to_ptr.vmem [resolvable:$true] %s342
          %345 = dma.hbm_to_vmem [thread:$0]  %s341, 16, %s343, [#allocation12]
        $region28: #{tpu_custom_call.1} parent=11 // pred_fallthru
          _
        // Predicated region
        $region29: #{tpu_custom_call.1} parent=11 // pred_check
          %p346 = pneg %p211
        $region30: #{tpu_custom_call.1} parent=11 // pred_check_branch
          %348 = sbr.rel (%p346) target = $region32
        $region31: #{tpu_custom_call.1} parent=11 // pred_region
          %350 = vsyncadd [#allocation15], 0
          %s351 = sshll.u32 %s7, 4
          %s352 = int_to_ptr.hbm [resolvable:$true] %s351
          %s353 = sshll.u32 [#allocation14], 4
          %s354 = int_to_ptr.vmem [resolvable:$true] %s353
          %359 = dma.hbm_to_vmem [thread:$0]  %s352, 2048, %s354, [#allocation15], 128, 128, 8
        $region32: #{tpu_custom_call.1} parent=11 // pred_fallthru
          _
        // Predicated region
        $region33: #{tpu_custom_call.1} parent=11 // pred_check
          %p360 = pneg %p232
        $region34: #{tpu_custom_call.1} parent=11 // pred_check_branch
          %362 = sbr.rel (%p360) target = $region36
        $region35: #{tpu_custom_call.1} parent=11 // pred_region
          %364 = vsyncadd [#allocation15], 0
          %s366 = sshll.u32 %s8, 4
          %s367 = int_to_ptr.hbm [resolvable:$true] %s366
          %s368 = sshll.u32 [#allocation16], 4
          %s369 = int_to_ptr.vmem [resolvable:$true] %s368
          %371 = dma.hbm_to_vmem [thread:$0]  %s367, 16, %s369, [#allocation15]
        $region36: #{tpu_custom_call.1} parent=11 // pred_fallthru
          _
        // Predicated region
        $region37: #{tpu_custom_call.1} parent=11 // pred_check
          %p372 = pneg %p253
        $region38: #{tpu_custom_call.1} parent=11 // pred_check_branch
          %374 = sbr.rel (%p372) target = $region40
        $region39: #{tpu_custom_call.1} parent=11 // pred_region
          _
        $region40: #{tpu_custom_call.1} parent=11 // pred_fallthru
          _
      $region12: #{tpu_custom_call.1} parent=5 // pred_fallthru
        _
      %p375 = scmp.lt.s32.totalorder %s28, 2
      // Predicated region
      $region41: #{tpu_custom_call.1} parent=5 // pred_check
        %p376 = pneg %p375
      $region42: #{tpu_custom_call.1} parent=5 // pred_check_branch
        %378 = sbr.rel (%p376) target = $region44
      $region43: #{tpu_custom_call.1} parent=5 // pred_region
        // Predicated region
        $region45: #{tpu_custom_call.1} parent=43 // pred_check
          %p379 = pneg %p48
        $region46: #{tpu_custom_call.1} parent=43 // pred_check_branch
          %381 = sbr.rel (%p379) target = $region48
        $region47: #{tpu_custom_call.1} parent=43 // pred_region
          %s382 = sand.u32 %s38, 1
          %s383 = scalar_lea.sflag [#allocation3], %s382
          %s384 = sand.u32 %s38, 1
          %s385 = smul.addr %s384, 8
          %s386 = scalar_lea.vmem [#allocation2], %s385
          %388 = vsyncadd %s383, 0
          %s389 = smul.addr %s28, 8
          %s390 = scalar_lea.hbm %s0, %s389
          %s392 = sshll.u32 %s390, 4
          %s393 = int_to_ptr.hbm [resolvable:$true] %s392
          %s394 = sshll.u32 %s386, 4
          %s395 = int_to_ptr.vmem [resolvable:$true] %s394
          %397 = dma.hbm_to_vmem [thread:$0]  %s393, 128, %s395, %s383
        $region48: #{tpu_custom_call.1} parent=43 // pred_fallthru
          _
        // Predicated region
        $region49: #{tpu_custom_call.1} parent=43 // pred_check
          %p398 = pneg %p74
        $region50: #{tpu_custom_call.1} parent=43 // pred_check_branch
          %400 = sbr.rel (%p398) target = $region52
        $region51: #{tpu_custom_call.1} parent=43 // pred_region
          %s401 = sand.u32 %s28, 1
          %s402 = scalar_lea.sflag [#allocation6], %s401
          %s403 = sand.u32 %s64, 1
          %s404 = smul.addr %s403, 8
          %s405 = scalar_lea.vmem [#allocation5], %s404
          %407 = vsyncadd %s402, 0
          %s408 = smul.addr %s28, 8
          %s409 = scalar_lea.hbm %s1, %s408
          %s411 = sshll.u32 %s409, 4
          %s412 = int_to_ptr.hbm [resolvable:$true] %s411
          %s413 = sshll.u32 %s405, 4
          %s414 = int_to_ptr.vmem [resolvable:$true] %s413
          %416 = dma.hbm_to_vmem [thread:$0]  %s412, 128, %s414, %s402
        $region52: #{tpu_custom_call.1} parent=43 // pred_fallthru
          _
        // Predicated region
        $region53: #{tpu_custom_call.1} parent=43 // pred_check
          %p417 = pneg %p100
        $region54: #{tpu_custom_call.1} parent=43 // pred_check_branch
          %419 = sbr.rel (%p417) target = $region56
        $region55: #{tpu_custom_call.1} parent=43 // pred_region
          %s420 = sand.u32 %s28, 1
          %s421 = scalar_lea.sflag [#allocation6], %s420
          %s422 = sand.u32 %s90, 1
          %s423 = smul.addr %s422, 8
          %s424 = scalar_lea.vmem [#allocation7], %s423
          %426 = vsyncadd %s421, 0
          %s427 = smul.addr %s28, 8
          %s428 = scalar_lea.hbm %s2, %s427
          %s430 = sshll.u32 %s428, 4
          %s431 = int_to_ptr.hbm [resolvable:$true] %s430
          %s432 = sshll.u32 %s424, 4
          %s433 = int_to_ptr.vmem [resolvable:$true] %s432
          %435 = dma.hbm_to_vmem [thread:$0]  %s431, 128, %s433, %s421
        $region56: #{tpu_custom_call.1} parent=43 // pred_fallthru
          _
      $region44: #{tpu_custom_call.1} parent=5 // pred_fallthru
        _
      %p436 = scmp.le.s32.totalorder 1, %s28
      %p437 = scmp.lt.s32.totalorder %s28, 3
      %p438 = pnand %p436, %p437
      %p439 = pneg %p438
      // Predicated region
      $region57: #{tpu_custom_call.1} parent=5 // pred_check
        _
      $region58: #{tpu_custom_call.1} parent=5 // pred_check_branch
        %441 = sbr.rel (%p438) target = $region60
      $region59: #{tpu_custom_call.1} parent=5 // pred_region
        %s442 = ssub.s32 %s28, 1
        %s443 = sand.u32 %s41, 1
        %s444 = scalar_lea.sflag [#allocation3], %s443
        %s445 = sand.u32 %s41, 1
        %s446 = smul.addr %s445, 8
        %s447 = scalar_lea.vmem [#allocation2], %s446
        // Predicated region
        $region61: #{tpu_custom_call.1} parent=59 // pred_check
          %p448 = pneg %p54
        $region62: #{tpu_custom_call.1} parent=59 // pred_check_branch
          %450 = sbr.rel (%p448) target = $region64
        $region63: #{tpu_custom_call.1} parent=59 // pred_region
          %452 = dma.done %s444, 128
        $region64: #{tpu_custom_call.1} parent=59 // pred_fallthru
          _
        %s453 = sand.u32 %s33, 1
        %s454 = scalar_lea.sflag [#allocation6], %s453
        %s455 = sand.u32 %s67, 1
        %s456 = smul.addr %s455, 8
        %s457 = scalar_lea.vmem [#allocation5], %s456
        // Predicated region
        $region65: #{tpu_custom_call.1} parent=59 // pred_check
          %p458 = pneg %p80
        $region66: #{tpu_custom_call.1} parent=59 // pred_check_branch
          %460 = sbr.rel (%p458) target = $region68
        $region67: #{tpu_custom_call.1} parent=59 // pred_region
          %462 = dma.done %s454, 128
        $region68: #{tpu_custom_call.1} parent=59 // pred_fallthru
          _
        %s463 = sand.u32 %s33, 1
        %s464 = scalar_lea.sflag [#allocation6], %s463
        %s465 = sand.u32 %s93, 1
        %s466 = smul.addr %s465, 8
        %s467 = scalar_lea.vmem [#allocation7], %s466
        // Predicated region
        $region69: #{tpu_custom_call.1} parent=59 // pred_check
          %p468 = pneg %p106
        $region70: #{tpu_custom_call.1} parent=59 // pred_check_branch
          %470 = sbr.rel (%p468) target = $region72
        $region71: #{tpu_custom_call.1} parent=59 // pred_region
          %472 = dma.done %s464, 128
        $region72: #{tpu_custom_call.1} parent=59 // pred_fallthru
          _
        // Predicated region
        $region73: #{tpu_custom_call.1} parent=59 // pred_check
          %p473 = pneg %p127
        $region74: #{tpu_custom_call.1} parent=59 // pred_check_branch
          %475 = sbr.rel (%p473) target = $region76
        $region75: #{tpu_custom_call.1} parent=59 // pred_region
          %477 = dma.done [#allocation9], 512
        $region76: #{tpu_custom_call.1} parent=59 // pred_fallthru
          _
        // Predicated region
        $region77: #{tpu_custom_call.1} parent=59 // pred_check
          %p478 = pneg %p148
        $region78: #{tpu_custom_call.1} parent=59 // pred_check_branch
          %480 = sbr.rel (%p478) target = $region80
        $region79: #{tpu_custom_call.1} parent=59 // pred_region
          %482 = dma.done [#allocation9], 16
        $region80: #{tpu_custom_call.1} parent=59 // pred_fallthru
          _
        // Predicated region
        $region81: #{tpu_custom_call.1} parent=59 // pred_check
          %p483 = pneg %p169
        $region82: #{tpu_custom_call.1} parent=59 // pred_check_branch
          %485 = sbr.rel (%p483) target = $region84
        $region83: #{tpu_custom_call.1} parent=59 // pred_region
          %487 = dma.done [#allocation12], 512
        $region84: #{tpu_custom_call.1} parent=59 // pred_fallthru
          _
        // Predicated region
        $region85: #{tpu_custom_call.1} parent=59 // pred_check
          %p488 = pneg %p190
        $region86: #{tpu_custom_call.1} parent=59 // pred_check_branch
          %490 = sbr.rel (%p488) target = $region88
        $region87: #{tpu_custom_call.1} parent=59 // pred_region
          %492 = dma.done [#allocation12], 16
        $region88: #{tpu_custom_call.1} parent=59 // pred_fallthru
          _
        // Predicated region
        $region89: #{tpu_custom_call.1} parent=59 // pred_check
          %p493 = pneg %p211
        $region90: #{tpu_custom_call.1} parent=59 // pred_check_branch
          %495 = sbr.rel (%p493) target = $region92
        $region91: #{tpu_custom_call.1} parent=59 // pred_region
          %497 = dma.done [#allocation15], 2048
        $region92: #{tpu_custom_call.1} parent=59 // pred_fallthru
          _
        // Predicated region
        $region93: #{tpu_custom_call.1} parent=59 // pred_check
          %p498 = pneg %p232
        $region94: #{tpu_custom_call.1} parent=59 // pred_check_branch
          %500 = sbr.rel (%p498) target = $region96
        $region95: #{tpu_custom_call.1} parent=59 // pred_region
          %502 = dma.done [#allocation15], 16
        $region96: #{tpu_custom_call.1} parent=59 // pred_fallthru
          _
        %s503 = sand.u32 %s41, 1
        %s504 = scalar_lea.sflag [#allocation3], %s503
        %s505 = sand.u32 %s41, 1
        %s506 = smul.addr %s505, 8
        %s507 = scalar_lea.vmem [#allocation2], %s506
        %p508 = pneg %p54
        %p509 = pneg %p51
        %s510 = sand.u32 %s33, 1
        %s511 = scalar_lea.sflag [#allocation6], %s510
        %s512 = sand.u32 %s67, 1
        %s513 = smul.addr %s512, 8
        %s514 = scalar_lea.vmem [#allocation5], %s513
        %p515 = pneg %p80
        %p516 = pneg %p77
        %s517 = sand.u32 %s33, 1
        %s518 = scalar_lea.sflag [#allocation6], %s517
        %s519 = sand.u32 %s93, 1
        %s520 = smul.addr %s519, 8
        %s521 = scalar_lea.vmem [#allocation7], %s520
        %p522 = pneg %p106
        %p523 = pneg %p103
        %p524 = pneg %p127
        %p525 = pneg %p124
        %p526 = pneg %p148
        %p527 = pneg %p145
        %p528 = pneg %p169
        %p529 = pneg %p166
        %p530 = pneg %p190
        %p531 = pneg %p187
        %p532 = pneg %p211
        %p533 = pneg %p208
        %p534 = pneg %p232
        %p535 = pneg %p229
        %p536 = pneg %p253
        %p537 = pneg %p250
        %p538 = pneg %p279
        %p539 = pneg %p276
        %s540 = sand.u32 %s266, 1
        %s541 = scalar_lea.sflag [#allocation4], %s540
        %s542 = sand.u32 %s266, 1
        %s543 = smul.addr %s542, 8
        %s544 = scalar_lea.vmem [#allocation17], %s543
        %v545 = vld [vmem:[%s447] sm:$0xff]
        %v546 = vld [vmem:[%s457] sm:$0xff]
        %v547 = vld [vmem:[%s467] sm:$0xff]
        %v548 = vld [vmem:[#allocation8] sm:$0xff]
        %v549 = vld [vmem:[#allocation8 + $0x8] sm:$0xff]
        %v550 = vld [vmem:[#allocation8 + $0x10] sm:$0xff]
        %v551 = vld [vmem:[#allocation8 + $0x18] sm:$0xff]
        %v552 = vld [vmem:[#allocation10] sm:$0x1]
        %v554 = vperm.slane %v552, 0
        %vm556 = vcmask 261120
        %v558 = vsel %vm556, %v545, 0
        %560 = vmatpush.msra.mxu0 0.0
        %561 = vmatpush.msra.mxu0 0.0
        %562 = vmatpush.msra.mxu0 0.0
        %563 = vmatpush.msra.mxu0 0.0
        %564 = vmatpush.msra.mxu0 0.0
        %565 = vmatpush.msra.mxu0 0.0
        %566 = vmatpush.msra.mxu0 0.0
        %567 = vmatpush.msra.mxu0 0.0
        %568 = vmatpush.msra.mxu0 0.0
        %569 = vmatpush.msra.mxu0 0.0
        %570 = vmatpush.msra.mxu0 0.0
        %571 = vmatpush.msra.mxu0 0.0
        %572 = vmatpush.msra.mxu0 %v551
        %573 = vmatpush.msra.mxu0 %v550
        %574 = vmatpush.msra.mxu0 %v549
        %575 = vmatpush.msra.mxu0 %v548
        %576 = vmatmul.f32.gmra.mxu0 %v558
        %v577 = vpop.f32.mrf.mxu0
        %v578 = vadd.f32 %v554, %v577
        %579 = vdwg.mxu0
        %v580 = vld [vmem:[#allocation11] sm:$0xff]
        %v581 = vld [vmem:[#allocation11 + $0x8] sm:$0xff]
        %v582 = vld [vmem:[#allocation11 + $0x10] sm:$0xff]
        %v583 = vld [vmem:[#allocation11 + $0x18] sm:$0xff]
        %v584 = vld [vmem:[#allocation13] sm:$0x1]
        %v586 = vperm.slane %v584, 0
        %588 = vmatpush.msra.mxu0 0.0
        %589 = vmatpush.msra.mxu0 0.0
        %590 = vmatpush.msra.mxu0 0.0
        %591 = vmatpush.msra.mxu0 0.0
        %592 = vmatpush.msra.mxu0 0.0
        %593 = vmatpush.msra.mxu0 0.0
        %594 = vmatpush.msra.mxu0 0.0
        %595 = vmatpush.msra.mxu0 0.0
        %596 = vmatpush.msra.mxu0 0.0
        %597 = vmatpush.msra.mxu0 0.0
        %598 = vmatpush.msra.mxu0 0.0
        %599 = vmatpush.msra.mxu0 0.0
        %600 = vmatpush.msra.mxu0 %v583
        %601 = vmatpush.msra.mxu0 %v582
        %602 = vmatpush.msra.mxu0 %v581
        %603 = vmatpush.msra.mxu0 %v580
        %604 = vmatmul.f32.gmra.mxu0 %v558
        %v605 = vpop.f32.mrf.mxu0
        %v606 = vadd.f32 %v586, %v605
        %607 = vdwg.mxu0
        %v608 = vld [vmem:[#allocation14] sm:$0xff]
        %v609 = vld [vmem:[#allocation14 + $0x8] sm:$0xff]
        %v610 = vld [vmem:[#allocation14 + $0x10] sm:$0xff]
        %v611 = vld [vmem:[#allocation14 + $0x18] sm:$0xff]
        %v612 = vld [vmem:[#allocation14 + $0x20] sm:$0xff]
        %v613 = vld [vmem:[#allocation14 + $0x28] sm:$0xff]
        %v614 = vld [vmem:[#allocation14 + $0x30] sm:$0xff]
        %v615 = vld [vmem:[#allocation14 + $0x38] sm:$0xff]
        %v616 = vld [vmem:[#allocation14 + $0x40] sm:$0xff]
        %v617 = vld [vmem:[#allocation14 + $0x48] sm:$0xff]
        %v618 = vld [vmem:[#allocation14 + $0x50] sm:$0xff]
        %v619 = vld [vmem:[#allocation14 + $0x58] sm:$0xff]
        %v620 = vld [vmem:[#allocation14 + $0x60] sm:$0xff]
        %v621 = vld [vmem:[#allocation14 + $0x68] sm:$0xff]
        %v622 = vld [vmem:[#allocation14 + $0x70] sm:$0xff]
        %v623 = vld [vmem:[#allocation14 + $0x78] sm:$0xff]
        %v624 = vld [vmem:[#allocation16] sm:$0x1]
        %v626 = vperm.slane %v624, 0
        %628 = vmatpush.msra.mxu0 %v623
        %629 = vmatpush.msra.mxu0 %v622
        %630 = vmatpush.msra.mxu0 %v621
        %631 = vmatpush.msra.mxu0 %v620
        %632 = vmatpush.msra.mxu0 %v619
        %633 = vmatpush.msra.mxu0 %v618
        %634 = vmatpush.msra.mxu0 %v617
        %635 = vmatpush.msra.mxu0 %v616
        %636 = vmatpush.msra.mxu0 %v615
        %637 = vmatpush.msra.mxu0 %v614
        %638 = vmatpush.msra.mxu0 %v613
        %639 = vmatpush.msra.mxu0 %v612
        %640 = vmatpush.msra.mxu0 %v611
        %641 = vmatpush.msra.mxu0 %v610
        %642 = vmatpush.msra.mxu0 %v609
        %643 = vmatpush.msra.mxu0 %v608
        %644 = vmatmul.f32.gmra.mxu0 %v546
        %v645 = vpop.f32.mrf.mxu0
        %v646 = vadd.f32 %v626, %v645
        %647 = vdwg.mxu0
        %648 = vrot.lane.b32.xlu0 %v646, 32
        %v649 = vpop.permute.xlu0 %648
        %v650 = vmax.f32 %v646, %v649
        %651 = vrot.lane.b32.xlu0 %v650, 64
        %v652 = vpop.permute.xlu0 %651
        %v653 = vmax.f32 %v650, %v652
        %v654 = vsub.f32 %v646, %v653
        %v655 = vmul.f32 %v654, 1.442695
        %v656 = vpow.pop %v655
        %657 = vrot.lane.b32.xlu0 %v656, 32
        %v658 = vpop.permute.xlu0 %657
        %v659 = vadd.f32 %v656, %v658
        %660 = vrot.lane.b32.xlu0 %v659, 64
        %v661 = vpop.permute.xlu0 %660
        %v662 = vadd.f32 %v659, %v661
        %v663 = vld [vmem:[%s9] sm:$0xff]
        %vm664 = vcmask 64512
        %v666 = vsel %vm664, %v547, 0
        %668 = vmatpush.msra.mxu0 0.0
        %669 = vmatpush.msra.mxu0 0.0
        %670 = vmatpush.msra.mxu0 0.0
        %671 = vmatpush.msra.mxu0 0.0
        %672 = vmatpush.msra.mxu0 0.0
        %673 = vmatpush.msra.mxu0 0.0
        %674 = vmatpush.msra.mxu0 0.0
        %675 = vmatpush.msra.mxu0 0.0
        %676 = vmatpush.msra.mxu0 0.0
        %677 = vmatpush.msra.mxu0 0.0
        %678 = vmatpush.msra.mxu0 0.0
        %679 = vmatpush.msra.mxu0 0.0
        %680 = vmatpush.msra.mxu0 0.0
        %681 = vmatpush.msra.mxu0 0.0
        %682 = vmatpush.msra.mxu0 0.0
        %683 = vmatpush.msra.mxu0 %v663
        %684 = vmatmul.f32.gmra.mxu0 %v666
        %v685 = vpop.f32.mrf.mxu0
        %v686 = vadd.f32 0.0, %v685
        %687 = vdwg.mxu0
        %vm688 = vcmp.eq.f32.partialorder %v686, 0.0
        %v689 = vsel %vm688, 1, 0
        %v690 = vcvt.s32.f32 %v689
        %v691 = vperm.slane %v606, 0
        %v692 = vmul.f32 %v690, %v691
        %vm693 = vcmp.eq.f32.partialorder %v686, 1.0
        %v694 = vsel %vm693, 1, 0
        %v695 = vcvt.s32.f32 %v694
        %v696 = vperm.slane %v606, 1
        %v697 = vmul.f32 %v695, %v696
        %vm698 = vcmp.eq.f32.partialorder %v686, 2.0
        %v699 = vsel %vm698, 1, 0
        %v700 = vcvt.s32.f32 %v699
        %v701 = vperm.slane %v606, 2
        %v702 = vmul.f32 %v700, %v701
        %vm703 = vcmp.eq.f32.partialorder %v686, 3.0
        %v704 = vsel %vm703, 1, 0
        %v705 = vcvt.s32.f32 %v704
        %v706 = vperm.slane %v606, 3
        %v707 = vmul.f32 %v705, %v706
        %vm708 = vcmp.eq.f32.partialorder %v686, 4.0
        %v709 = vsel %vm708, 1, 0
        %v710 = vcvt.s32.f32 %v709
        %v711 = vperm.slane %v606, 4
        %v712 = vmul.f32 %v710, %v711
        %vm713 = vcmp.eq.f32.partialorder %v686, 5.0
        %v714 = vsel %vm713, 1, 0
        %v715 = vcvt.s32.f32 %v714
        %v716 = vperm.slane %v606, 5
        %v717 = vmul.f32 %v715, %v716
        %vm718 = vcmp.eq.f32.partialorder %v686, 6.0
        %v719 = vsel %vm718, 1, 0
        %v720 = vcvt.s32.f32 %v719
        %v721 = vperm.slane %v606, 6
        %v722 = vmul.f32 %v720, %v721
        %vm723 = vcmp.eq.f32.partialorder %v686, 7.0
        %v724 = vsel %vm723, 1, 0
        %v725 = vcvt.s32.f32 %v724
        %v726 = vperm.slane %v606, 7
        %v727 = vmul.f32 %v725, %v726
        %v728 = vadd.f32 %v692, %v697
        %v729 = vadd.f32 %v702, %v707
        %v730 = vadd.f32 %v712, %v717
        %v731 = vadd.f32 %v722, %v727
        %v732 = vadd.f32 %v728, %v729
        %v733 = vadd.f32 %v730, %v731
        %v734 = vadd.f32 %v732, %v733
        %v735 = vmul.f32 %v656, %v734
        %736 = vrot.lane.b32.xlu0 %v735, 32
        %v737 = vpop.permute.xlu0 %736
        %v738 = vadd.f32 %v735, %v737
        %739 = vrot.lane.b32.xlu0 %v738, 64
        %v740 = vpop.permute.xlu0 %739
        %v741 = vadd.f32 %v738, %v740
        %v742 = vrcp.pop %v662
        %v743 = vmul.f32 %v662, %v742
        %v744 = vsub.f32 1.0, %v743
        %v745 = vmul.f32 %v742, %v744
        %v746 = vadd.f32 %v742, %v745
        %vm747 = vweird.f32 %v662
        %vm748 = vweird.f32 %v742
        %vm749 = vmor %vm747, %vm748
        %v750 = vsel %vm749, %v742, %v746
        %v751 = vand.u32 2147483647, %v662
        %vm752 = vcmp.eq.f32.partialorder %v751, 8.507059e+37
        %v753 = vand.u32 %v662, 2147483648
        %v754 = vor.u32 1.1754944e-38, %v753
        %v755 = vsel %vm752, %v754, %v750
        %v756 = vmul.f32 %v741, %v755
        %v757 = vadd.f32 %v578, %v756
        %758 = vst.msk [vmem:[%s544] sm:$0xff] %vm556, %v757
        %s759 = sand.u32 %s266, 1
        %s760 = scalar_lea.sflag [#allocation4], %s759
        %s761 = sand.u32 %s266, 1
        %s762 = smul.addr %s761, 8
        %s763 = scalar_lea.vmem [#allocation17], %s762
        // Predicated region
        $region97: #{tpu_custom_call.1} parent=59 // pred_check
          %p764 = pneg %p276
        $region98: #{tpu_custom_call.1} parent=59 // pred_check_branch
          %766 = sbr.rel (%p764) target = $region100
        $region99: #{tpu_custom_call.1} parent=59 // pred_region
          %768 = vsyncadd %s760, 0
          %s769 = smul.addr %s33, 8
          %s770 = scalar_lea.hbm %s10, %s769
          %s772 = sshll.u32 %s763, 4
          %s773 = int_to_ptr.vmem [resolvable:$true] %s772
          %s774 = sshll.u32 %s770, 4
          %s775 = int_to_ptr.hbm [resolvable:$true] %s774
          %777 = dma.vmem_to_hbm [thread:$0]  %s773, 128, %s775, %s760
        $region100: #{tpu_custom_call.1} parent=59 // pred_fallthru
          _
      $region60: #{tpu_custom_call.1} parent=5 // pred_fallthru
        _
      %p778 = scmp.le.s32.totalorder 2, %s28
      // Predicated region
      $region101: #{tpu_custom_call.1} parent=5 // pred_check
        %p779 = pneg %p778
      $region102: #{tpu_custom_call.1} parent=5 // pred_check_branch
        %781 = sbr.rel (%p779) target = $region104
      $region103: #{tpu_custom_call.1} parent=5 // pred_region
        %s782 = ssub.s32 %s28, 2
        // Predicated region
        $region105: #{tpu_custom_call.1} parent=103 // pred_check
          %p783 = pneg %p282
        $region106: #{tpu_custom_call.1} parent=103 // pred_check_branch
          %785 = sbr.rel (%p783) target = $region108
        $region107: #{tpu_custom_call.1} parent=103 // pred_region
          %s786 = sand.u32 %s267, 1
          %s787 = scalar_lea.sflag [#allocation4], %s786
          %s788 = sand.u32 %s267, 1
          %s789 = smul.addr %s788, 8
          %s790 = scalar_lea.vmem [#allocation17], %s789
          %792 = dma.done %s787, 128
        $region108: #{tpu_custom_call.1} parent=103 // pred_fallthru
          _
      $region104: #{tpu_custom_call.1} parent=5 // pred_fallthru
        _
    $region6: #{tpu_custom_call.1} parent=1 // loop_footer
      %s32 = sadd.s32 1, %s28
    $region7: #{tpu_custom_call.1} parent=1 // loop_footer_branch
      %27 = sbr.rel target = $region3
    $region8: #{tpu_custom_call.1} parent=1 // loop_exit
      _
    %793 = vsyncpa [#allocation3], 1
    %s794 = scalar_lea.sflag [#allocation3], 1
    %795 = vsyncpa %s794, 1
    %796 = vsyncpa [#allocation6], 1
    %s797 = scalar_lea.sflag [#allocation6], 1
    %798 = vsyncpa %s797, 1
    %799 = vsyncpa [#allocation9], 1
    %800 = vsyncpa [#allocation12], 1
    %801 = vsyncpa [#allocation15], 1
    %802 = vsyncpa [#allocation4], 1
    %s803 = scalar_lea.sflag [#allocation4], 1
    %804 = vsyncpa %s803, 1

</llo_original>
